<compile_context>
chip_gen: v6e
topology: v6e:2x2x1
jax: 0.10.0
libtpu: 0.0.40
codegen_flags: <defaults>
</compile_context>

<pallas_src>
import functools

import jax
import jax.numpy as jnp
from jax.experimental import pallas as pl
from jax.experimental.pallas import tpu as pltpu


# ---------------------------------------------------------------------------
# Kernel
# ---------------------------------------------------------------------------
def _mlp_kernel(x_ref, wgu_ref, wd_ref, o_ref, acc_ref):
    # x_ref:   (TM, H)      activation row tile (bf16), resident across I axis
    # wgu_ref: (2, H, TI)   [gate; up] weight chunk for this I-tile (bf16)
    # wd_ref:  (TI, H)      down_proj weight chunk for this I-tile (bf16)
    # o_ref:   (TM, H)      output tile (written once, at the last I step)
    # acc_ref: (TM, H) f32  VMEM accumulator, resident across the I axis
    i = pl.program_id(1)

    @pl.when(i == 0)
    def _init():
        acc_ref[...] = jnp.zeros_like(acc_ref)

    x = x_ref[...]
    gate = jnp.dot(x, wgu_ref[0], preferred_element_type=jnp.float32)
    up = jnp.dot(x, wgu_ref[1], preferred_element_type=jnp.float32)
    # SiLU(gate) * up for this I-chunk, in f32 (EUP sigmoid + VPU mul).
    h = (gate * jax.nn.sigmoid(gate)) * up
    # Accumulate the partial down projection for this I-chunk (MXU, f32 acc).
    acc_ref[...] += jnp.dot(h.astype(wd_ref.dtype), wd_ref[...],
                            preferred_element_type=jnp.float32)

    @pl.when(i == pl.num_programs(1) - 1)
    def _finalize():
        o_ref[...] = acc_ref[...].astype(o_ref.dtype)


# ---------------------------------------------------------------------------
# One-time weight preparation (parameter-load time, NOT per forward)
# ---------------------------------------------------------------------------
def prepare_weights(wg, wu, wd, dtype=jnp.bfloat16):
    """wg, wu: [I, H] (PyTorch nn.Linear layout), wd: [H, I].

    Returns wgu: (2, H, I) stacked [gate; up] and wd_t: (I, H), cast to dtype.
    """
    wgu = jnp.stack([wg.T, wu.T], axis=0).astype(dtype)   # (2, H, I)
    wd_t = wd.T.astype(dtype)                             # (I, H)
    return wgu, wd_t


# ---------------------------------------------------------------------------
# Tile selection
# ---------------------------------------------------------------------------
def _round_up(x, m):
    return (x + m - 1) // m * m


def _vmem_bytes(block_m, block_i, H, w_bytes=2, x_bytes=2):
    """Conservative VMEM estimate: double-buffered windows + f32 accumulator."""
    x_tile = block_m * H * x_bytes
    out_tile = block_m * H * x_bytes
    acc = block_m * H * 4
    wgu = 2 * H * block_i * w_bytes
    wd = block_i * H * w_bytes
    return 2 * (x_tile + out_tile + wgu + wd) + acc


def _vmem_capacity_bytes():
    try:
        return int(pltpu.get_tpu_info().vmem_capacity_bytes)
    except Exception:
        return 64 * 1024 * 1024  # conservative: v7x per-TC VMEM


def _choose_tiles(M, H, I, budget_bytes):
    """Maximize block_m (amortizes weight streaming), keep block_i >= 256 for
    MXU width where possible, all under the VMEM budget."""
    m8 = max(_round_up(M, 8), 8)
    bm_opts = [c for c in (1024, 512, 256, 128, 64, 32, 16, 8) if c <= m8] or [m8]
    bi_big = [c for c in (512, 256) if I % c == 0]
    bi_small = [c for c in (128,) if I % c == 0] or [I]
    for bi_opts in (bi_big, bi_small):
        for bm in bm_opts:
            for bi in bi_opts:
                if _vmem_bytes(bm, bi, H) <= budget_bytes:
                    return bm, bi
    return bm_opts[-1], bi_small[-1]


# ---------------------------------------------------------------------------
# pallas_call wrapper
# ---------------------------------------------------------------------------
@functools.partial(jax.jit,
                   static_argnames=("block_m", "block_i", "vmem_limit"))
def _mlp_pallas(x, wgu, wd_t, *, block_m, block_i, vmem_limit):
    B, S, H = x.shape
    I = wgu.shape[2]
    M = B * S
    M_pad = _round_up(max(M, block_m), block_m)

    compute_dtype = wgu.dtype
    x2 = x.reshape(M, H).astype(compute_dtype)
    if M_pad != M:
        x2 = jnp.pad(x2, ((0, M_pad - M), (0, 0)))

    grid = (M_pad // block_m, I // block_i)
    w_bytes = (wgu.size + wd_t.size) * wgu.dtype.itemsize
    cost = pl.CostEstimate(
        flops=6 * M_pad * H * I,
        transcendentals=M_pad * I,
        bytes_accessed=(M_pad * H * x2.dtype.itemsize          # read x
                        + M_pad * H * x.dtype.itemsize          # write out
                        + grid[0] * w_bytes),                   # weights / m-tile
    )

    out = pl.pallas_call(
        _mlp_kernel,
        out_shape=jax.ShapeDtypeStruct((M_pad, H), x.dtype),
        grid_spec=pltpu.PrefetchScalarGridSpec(
            num_scalar_prefetch=0,
            grid=grid,
            in_specs=[
                # activation row tile: constant across the I axis (no re-DMA)
                pl.BlockSpec((block_m, H), lambda m, i: (m, 0)),
                # stacked gate/up weight chunk for I-tile i
                pl.BlockSpec((2, H, block_i), lambda m, i: (0, 0, i)),
                # down_proj weight chunk for I-tile i
                pl.BlockSpec((block_i, H), lambda m, i: (i, 0)),
            ],
            out_specs=pl.BlockSpec((block_m, H), lambda m, i: (m, 0)),
            scratch_shapes=[pltpu.VMEM((block_m, H), jnp.float32)],
        ),
        compiler_params=pltpu.CompilerParams(
            dimension_semantics=("parallel", "arbitrary"),
            vmem_limit_bytes=vmem_limit,
        ),
        cost_estimate=cost,
    )(x2, wgu, wd_t)
    return out[:M].reshape(B, S, H)


def deepseek_v2_mlp(x, wgu, wd_t, *, block_m=None, block_i=None):
    """x: [B, S, H]; wgu: [2, H, I]; wd_t: [I, H] (from prepare_weights)."""
    B, S, H = x.shape
    I = wgu.shape[2]
    assert H % 128 == 0, f"H={H} must be a multiple of 128 (lane axis)"
    assert I % 128 == 0, f"I={I} must be a multiple of 128 (lane axis)"

    cap = _vmem_capacity_bytes()
    budget = int(0.65 * cap)
    vmem_limit = int(0.80 * cap)

    auto_m, auto_i = _choose_tiles(B * S, H, I, budget)
    bm = auto_m if block_m is None else _round_up(
        min(block_m, _round_up(B * S, 8)), 8)
    bi = auto_i if block_i is None else block_i
    assert I % bi == 0, f"I={I} must be divisible by block_i={bi}"

    return _mlp_pallas(x, wgu, wd_t, block_m=int(bm), block_i=int(bi),
                       vmem_limit=int(vmem_limit))


# ---------------------------------------------------------------------------
# Reference + self-test
# ---------------------------------------------------------------------------
def _reference(x, wg, wu, wd):
    """Pure-JAX reference mimicking the kernel's bf16-weight / f32-acc recipe."""
    xf = x.astype(jnp.float32)
    gate = jnp.einsum("bsh,ih->bsi", xf, wg.astype(jnp.float32))
    up = jnp.einsum("bsh,ih->bsi", xf, wu.astype(jnp.float32))
    h = jax.nn.silu(gate) * up
    h = h.astype(wd.dtype).astype(jnp.float32)   # same quantization as kernel
    return jnp.einsum("bsi,hi->bsh", h, wd.astype(jnp.float32))


if __name__ == "__main__":
    key = jax.random.PRNGKey(0)
    # Small but tile-able shapes: M = B*S = 128, H = 256, I = 512.
    B, S, H, I = 2, 64, 256, 512

    kx, kg, ku, kd = jax.random.split(key, 4)
    x = jax.random.normal(kx, (B, S, H), dtype=jnp.float32)
    # PyTorch nn.Linear layout [out, in], bias=False.
    wg = jax.random.normal(kg, (I, H), dtype=jnp.float32) * (1.0 / H ** 0.5)
    wu = jax.random.normal(ku, (I, H), dtype=jnp.float32) * (1.0 / H ** 0.5)
    wd = jax.random.normal(kd, (H, I), dtype=jnp.float32) * (1.0 / I ** 0.5)

    # One-time weight prep (bf16, pre-transposed / stacked).
    wgu, wd_t = prepare_weights(wg, wu, wd, dtype=jnp.bfloat16)
    x_bf16 = x.astype(jnp.bfloat16)

    ref = _reference(x_bf16, wg.astype(jnp.bfloat16), wu.astype(jnp.bfloat16),
                     wd.astype(jnp.bfloat16)).astype(jnp.float32)

    # --- Test 1: explicit tiles -> grid (2, 2) exercises both the parallel M
    # axis and the accumulated (arbitrary) I axis.
    out = deepseek_v2_mlp(x_bf16, wgu, wd_t, block_m=64, block_i=256)
    out = jax.block_until_ready(out)
    assert out.shape == (B, S, H)
    assert jnp.allclose(out.astype(jnp.float32), ref, atol=2e-2, rtol=2e-2), \
        "mismatch vs reference (explicit tiles)"

    # --- Test 2: auto tiles + non-divisible M (exercises the padding path).
    S2 = 50                                   # M = 100, not a tile multiple
    x2_bf16 = x_bf16[:, :S2, :]
    out2 = deepseek_v2_mlp(x2_bf16, wgu, wd_t)
    out2 = jax.block_until_ready(out2)
    assert out2.shape == (B, S2, H)
    assert jnp.allclose(out2.astype(jnp.float32), ref[:, :S2, :],
                        atol=2e-2, rtol=2e-2), \
        "mismatch vs reference (auto tiles / padded M)"

    print("KERNEL_OK")
</pallas_src>

<mosaic_0001>
module attributes {stable_mosaic.version = 11 : i64} {
  func.func @_mlp_kernel(%arg0: i32, %arg1: i32, %arg2: memref<64x256xbf16, #tpu.memory_space<vmem>>, %arg3: memref<2x256x256xbf16, #tpu.memory_space<vmem>>, %arg4: memref<256x256xbf16, #tpu.memory_space<vmem>>, %arg5: memref<64x256xbf16, #tpu.memory_space<vmem>>, %arg6: memref<64x256xf32, #tpu.memory_space<vmem>>) attributes {dimension_semantics = [#tpu.dimension_semantics<parallel>, #tpu.dimension_semantics<arbitrary>], iteration_bounds = array<i64: 2, 2>, scalar_prefetch = 0 : i64, scratch_operands = 1 : i64, tpu.core_type = #tpu.core_type<tc>, window_params = [{transform_indices = @transform_0, window_bounds = array<i64: 64, 256>}, {transform_indices = @transform_1, window_bounds = array<i64: 2, 256, 256>}, {transform_indices = @transform_2, window_bounds = array<i64: 256, 256>}, {transform_indices = @transform_3, window_bounds = array<i64: 64, 256>}]} {
    %c0_i32 = arith.constant 0 : i32
    %0 = arith.cmpi eq, %arg1, %c0_i32 : i32
    %1 = arith.extui %0 : i1 to i32
    %c0_i32_0 = arith.constant 0 : i32
    %2 = arith.cmpi ne, %1, %c0_i32_0 : i32
    scf.if %2 {
      %cst_17 = arith.constant 0.000000e+00 : f32
      %26 = vector.broadcast %cst_17 : f32 to vector<64x256xf32>
      %c0_18 = arith.constant 0 : index
      %c0_19 = arith.constant 0 : index
      %27 = vector.load %arg6[%c0_18, %c0_19] : memref<64x256xf32, #tpu.memory_space<vmem>>, vector<64x256xf32>
      tpu.vector_store %arg6[%c0_18, %c0_19], %26 {strides = array<i32>} : memref<64x256xf32, #tpu.memory_space<vmem>>, vector<64x256xf32>,
    } else {
    }
    %c0 = arith.constant 0 : index
    %c0_1 = arith.constant 0 : index
    %3 = vector.load %arg2[%c0, %c0_1] : memref<64x256xbf16, #tpu.memory_space<vmem>>, vector<64x256xbf16>
    %c0_2 = arith.constant 0 : index
    %c0_3 = arith.constant 0 : index
    %c0_4 = arith.constant 0 : index
    %4 = vector.load %arg3[%c0_2, %c0_3, %c0_4] : memref<2x256x256xbf16, #tpu.memory_space<vmem>>, vector<1x256x256xbf16>
    %5 = vector.shape_cast %4 : vector<1x256x256xbf16> to vector<256x256xbf16>
    %cst = arith.constant dense<0.000000e+00> : vector<64x256xf32>
    %6 = tpu.matmul %3, %5, %cst {dimension_numbers = #tpu.dot_dimension_numbers<[1], [0], [0], [1], [0, 0, 1, 1], [], []>} : vector<64x256xbf16>, vector<256x256xbf16>, vector<64x256xf32> -> vector<64x256xf32>
    %c1 = arith.constant 1 : index
    %c0_5 = arith.constant 0 : index
    %c0_6 = arith.constant 0 : index
    %7 = vector.load %arg3[%c1, %c0_5, %c0_6] : memref<2x256x256xbf16, #tpu.memory_space<vmem>>, vector<1x256x256xbf16>
    %8 = vector.shape_cast %7 : vector<1x256x256xbf16> to vector<256x256xbf16>
    %cst_7 = arith.constant dense<0.000000e+00> : vector<64x256xf32>
    %9 = tpu.matmul %3, %8, %cst_7 {dimension_numbers = #tpu.dot_dimension_numbers<[1], [0], [0], [1], [0, 0, 1, 1], [], []>} : vector<64x256xbf16>, vector<256x256xbf16>, vector<64x256xf32> -> vector<64x256xf32>
    %10 = arith.negf %6 : vector<64x256xf32>
    %11 = math.exp %10 : vector<64x256xf32>
    %cst_8 = arith.constant 1.000000e+00 : f32
    %12 = vector.broadcast %cst_8 : f32 to vector<64x256xf32>
    %13 = arith.addf %12, %11 : vector<64x256xf32>
    %14 = arith.divf %12, %13 : vector<64x256xf32>
    %15 = arith.mulf %6, %14 : vector<64x256xf32>
    %16 = arith.mulf %15, %9 : vector<64x256xf32>
    %c0_9 = arith.constant 0 : index
    %c0_10 = arith.constant 0 : index
    %17 = vector.load %arg6[%c0_9, %c0_10] : memref<64x256xf32, #tpu.memory_space<vmem>>, vector<64x256xf32>
    %18 = arith.truncf %16 : vector<64x256xf32> to vector<64x256xbf16>
    %c0_11 = arith.constant 0 : index
    %c0_12 = arith.constant 0 : index
    %19 = vector.load %arg4[%c0_11, %c0_12] : memref<256x256xbf16, #tpu.memory_space<vmem>>, vector<256x256xbf16>
    %cst_13 = arith.constant dense<0.000000e+00> : vector<64x256xf32>
    %20 = tpu.matmul %18, %19, %cst_13 {dimension_numbers = #tpu.dot_dimension_numbers<[1], [0], [0], [1], [0, 0, 1, 1], [], []>} : vector<64x256xbf16>, vector<256x256xbf16>, vector<64x256xf32> -> vector<64x256xf32>
    %21 = arith.addf %17, %20 : vector<64x256xf32>
    %c0_14 = arith.constant 0 : index
    %c0_15 = arith.constant 0 : index
    %22 = vector.load %arg6[%c0_14, %c0_15] : memref<64x256xf32, #tpu.memory_space<vmem>>, vector<64x256xf32>
    tpu.vector_store %arg6[%c0_14, %c0_15], %21 {strides = array<i32>} : memref<64x256xf32, #tpu.memory_space<vmem>>, vector<64x256xf32>,
    %c1_i32 = arith.constant 1 : i32
    %23 = arith.cmpi eq, %arg1, %c1_i32 : i32
    %24 = arith.extui %23 : i1 to i32
    %c0_i32_16 = arith.constant 0 : i32
    %25 = arith.cmpi ne, %24, %c0_i32_16 : i32
    scf.if %25 {
      %c0_17 = arith.constant 0 : index
      %c0_18 = arith.constant 0 : index
      %26 = vector.load %arg6[%c0_17, %c0_18] : memref<64x256xf32, #tpu.memory_space<vmem>>, vector<64x256xf32>
      %27 = arith.truncf %26 : vector<64x256xf32> to vector<64x256xbf16>
      %c0_19 = arith.constant 0 : index
      %c0_20 = arith.constant 0 : index
      %28 = vector.load %arg5[%c0_19, %c0_20] : memref<64x256xbf16, #tpu.memory_space<vmem>>, vector<64x256xbf16>
      tpu.vector_store %arg5[%c0_19, %c0_20], %27 {strides = array<i32>} : memref<64x256xbf16, #tpu.memory_space<vmem>>, vector<64x256xbf16>,
    } else {
    }
    return
  }
  func.func @transform_0(%arg0: i32, %arg1: i32) -> (i32, i32) {
    %c0_i32 = arith.constant 0 : i32
    %c0_i32_0 = arith.constant 0 : i32
    return %arg0, %c0_i32 : i32, i32
  }
  func.func @transform_1(%arg0: i32, %arg1: i32) -> (i32, i32, i32) {
    %c0_i32 = arith.constant 0 : i32
    %c0_i32_0 = arith.constant 0 : i32
    %c0_i32_1 = arith.constant 0 : i32
    return %c0_i32, %c0_i32_0, %arg1 : i32, i32, i32
  }
  func.func @transform_2(%arg0: i32, %arg1: i32) -> (i32, i32) {
    %c0_i32 = arith.constant 0 : i32
    %c0_i32_0 = arith.constant 0 : i32
    return %arg1, %c0_i32 : i32, i32
  }
  func.func @transform_3(%arg0: i32, %arg1: i32) -> (i32, i32) {
    %c0_i32 = arith.constant 0 : i32
    %c0_i32_0 = arith.constant 0 : i32
    return %arg0, %c0_i32 : i32, i32
  }
}

</mosaic_0001>

<llo_original>
// kernel: _mlp_pallas.1
$region0: #{_mlp_pallas.1}
  #allocation0 [shape = 'u32[]', space=smem, size = 0x4, offset = 0x4, fixed_abs, tag = 'smem constant byte address 0x4 - core index']
  #allocation1 [shape = 'u32[144,128]{1,0:T(1,128)}', space=vmem, size = 0x12000, scoped, tag = 'internal scratch']
  #allocation2 [shape = 'f32[64,256]{1,0:T(8,128)}', space=vmem, size = 0x10000, scoped, tag = 'scratch operand']
  %s0 = inlined_call_operand.hbm [shape: bf16[128,256], index: 0, kind: input, shape index: {}]
  %s1 = inlined_call_operand.hbm [shape: bf16[2,256,512], index: 1, kind: input, shape index: {}]
  %s2 = inlined_call_operand.hbm [shape: bf16[512,256], index: 2, kind: input, shape index: {}]
  %s3 = inlined_call_operand.hbm [shape: bf16[128,256], index: 3, kind: output, shape index: {}]
  %s4 = sld [smem:[#allocation0]]
  $region65: #{_mlp_pallas.1} parent=0
    _
  %s6 = ssub.s32 1, %s4
  %s7 = scalar_select 0, %s6, %s4
  $region1: #{_mlp_pallas.1} parent=0
    #allocation3 [shape = 'u8[65536]{0}', space=vmem, size = 0x10000, scoped, tag = 'input window, operand 0']
    #allocation4 [shape = 's32[2]{0}', space=sflag, size = 0x8, scoped, tag = 'scoped memory for _mlp_pallas.1']
    #allocation5 [shape = 's32[2]{0}', space=sflag, size = 0x8, scoped, tag = 'scoped memory for _mlp_pallas.1']
    #allocation6 [shape = 'u8[524288]{0}', space=vmem, size = 0x80000, scoped, tag = 'input window, operand 1']
    #allocation7 [shape = 's32[2]{0}', space=sflag, size = 0x8, scoped, tag = 'scoped memory for _mlp_pallas.1']
    #allocation8 [shape = 'u8[262144]{0}', space=vmem, size = 0x40000, scoped, tag = 'input window, operand 2']
    #allocation9 [shape = 'u8[65536]{0}', space=vmem, size = 0x10000, scoped, tag = 'output window, operand 0']
    %8 = vsyncpa [#allocation4], 0
    %s9 = scalar_lea.sflag [#allocation4], 1
    %10 = vsyncpa %s9, 0
    %11 = vsyncpa [#allocation7], 0
    %s12 = scalar_lea.sflag [#allocation7], 1
    %13 = vsyncpa %s12, 0
    %14 = vsyncpa [#allocation5], 0
    %s15 = scalar_lea.sflag [#allocation5], 1
    %16 = vsyncpa %s15, 0
    loop: start=0, step=1, limit=6
    $region2: #{_mlp_pallas.1} parent=1 // loop_pre_header
      _
    $region3: #{_mlp_pallas.1} parent=1 // loop_header
      %s18 = sphi 0, %s22
      %p19 = scmp.ge.s32.totalorder %s18, 6
      %s25 = sphi 0, %s37
      %s26 = sphi 0, %s33
      %s27 = sphi 0, %s25
      %s28 = sphi 0, %s26
      %s29 = sphi 0, %s27
      %s30 = sphi 0, %s28
      %s40 = sphi 0, %s42
      %s43 = sphi 0, %s40
      %s44 = sphi 0, %s43
      %s60 = sphi 0, %s44
      %s66 = sphi 0, %s68
      %s69 = sphi 0, %s66
      %s70 = sphi 0, %s69
      %s86 = sphi 0, %s70
      %s92 = sphi 0, %s94
      %s95 = sphi 0, %s92
      %s96 = sphi 0, %s95
      %s112 = sphi 0, %s96
      %s118 = sphi 0, %s120
      %s121 = sphi 0, %s118
      %s122 = sphi 0, %s121
      %s138 = sphi 0, %s122
    $region4: #{_mlp_pallas.1} parent=1 // loop_header_branch
      %21 = sbr.rel (%p19) target = $region8
    $region5: #{_mlp_pallas.1} parent=1 // loop_body
      %s23 = ssub.s32 %s18, 1
      %s24 = ssub.s32 %s18, 2
      %s31 = sadd.s32 1, %s26
      %p32 = scmp.ge.s32.totalorder %s31, 2
      %s33 = scalar_select %p32, 0, %s31
      %s34 = sadd.s32 1, %s25
      %s35 = scalar_select %p32, %s34, %s25
      %p36 = scmp.ge.s32.totalorder %s35, 2
      %s37 = scalar_select %p36, 0, %s35
      %s38 = ssub.s32 %s25, %s37
      %p39 = scmp.eq.s32.totalorder %s38, 0
      %s41 = sadd.s32 %s40, 1
      %s42 = scalar_select %p39, %s40, %s41
      %p45 = pneg %p39
      %p46 = scmp.eq.s32.totalorder %s18, 3
      %p47 = por %p45, %p46
      %p48 = scmp.ne.s32.totalorder %s40, %s43
      %p49 = scmp.eq.s32.totalorder %s18, 0
      %p50 = por %p48, %p49
      %p51 = scmp.ne.s32.totalorder %s40, %s43
      %p52 = scmp.eq.s32.totalorder %s23, 3
      %p53 = por %p51, %p52
      %p54 = scmp.ne.s32.totalorder %s43, %s44
      %p55 = scmp.eq.s32.totalorder %s23, 0
      %p56 = por %p54, %p55
      %p57 = scmp.ne.s32.totalorder %s43, %s44
      %p58 = scmp.eq.s32.totalorder %s24, 3
      %p59 = por %p57, %p58
      %p61 = scmp.ne.s32.totalorder %s44, %s60
      %p62 = scmp.eq.s32.totalorder %s24, 0
      %p63 = por %p61, %p62
      %s64 = ssub.s32 %s26, %s33
      %p65 = scmp.eq.s32.totalorder %s64, 0
      %s67 = sadd.s32 %s66, 1
      %s68 = scalar_select %p65, %s66, %s67
      %p71 = pneg %p65
      %p72 = scmp.eq.s32.totalorder %s18, 3
      %p73 = por %p71, %p72
      %p74 = scmp.ne.s32.totalorder %s66, %s69
      %p75 = scmp.eq.s32.totalorder %s18, 0
      %p76 = por %p74, %p75
      %p77 = scmp.ne.s32.totalorder %s66, %s69
      %p78 = scmp.eq.s32.totalorder %s23, 3
      %p79 = por %p77, %p78
      %p80 = scmp.ne.s32.totalorder %s69, %s70
      %p81 = scmp.eq.s32.totalorder %s23, 0
      %p82 = por %p80, %p81
      %p83 = scmp.ne.s32.totalorder %s69, %s70
      %p84 = scmp.eq.s32.totalorder %s24, 3
      %p85 = por %p83, %p84
      %p87 = scmp.ne.s32.totalorder %s70, %s86
      %p88 = scmp.eq.s32.totalorder %s24, 0
      %p89 = por %p87, %p88
      %s90 = ssub.s32 %s26, %s33
      %p91 = scmp.eq.s32.totalorder %s90, 0
      %s93 = sadd.s32 %s92, 1
      %s94 = scalar_select %p91, %s92, %s93
      %p97 = pneg %p91
      %p98 = scmp.eq.s32.totalorder %s18, 3
      %p99 = por %p97, %p98
      %p100 = scmp.ne.s32.totalorder %s92, %s95
      %p101 = scmp.eq.s32.totalorder %s18, 0
      %p102 = por %p100, %p101
      %p103 = scmp.ne.s32.totalorder %s92, %s95
      %p104 = scmp.eq.s32.totalorder %s23, 3
      %p105 = por %p103, %p104
      %p106 = scmp.ne.s32.totalorder %s95, %s96
      %p107 = scmp.eq.s32.totalorder %s23, 0
      %p108 = por %p106, %p107
      %p109 = scmp.ne.s32.totalorder %s95, %s96
      %p110 = scmp.eq.s32.totalorder %s24, 3
      %p111 = por %p109, %p110
      %p113 = scmp.ne.s32.totalorder %s96, %s112
      %p114 = scmp.eq.s32.totalorder %s24, 0
      %p115 = por %p113, %p114
      %s116 = ssub.s32 %s25, %s37
      %p117 = scmp.eq.s32.totalorder %s116, 0
      %s119 = sadd.s32 %s118, 1
      %s120 = scalar_select %p117, %s118, %s119
      %p123 = pneg %p117
      %p124 = scmp.eq.s32.totalorder %s18, 3
      %p125 = por %p123, %p124
      %p126 = scmp.ne.s32.totalorder %s118, %s121
      %p127 = scmp.eq.s32.totalorder %s18, 0
      %p128 = por %p126, %p127
      %p129 = scmp.ne.s32.totalorder %s118, %s121
      %p130 = scmp.eq.s32.totalorder %s23, 3
      %p131 = por %p129, %p130
      %p132 = scmp.ne.s32.totalorder %s121, %s122
      %p133 = scmp.eq.s32.totalorder %s23, 0
      %p134 = por %p132, %p133
      %p135 = scmp.ne.s32.totalorder %s121, %s122
      %p136 = scmp.eq.s32.totalorder %s24, 3
      %p137 = por %p135, %p136
      %p139 = scmp.ne.s32.totalorder %s122, %s138
      %p140 = scmp.eq.s32.totalorder %s24, 0
      %p141 = por %p139, %p140
      %p142 = scmp.le.s32.totalorder 1, %s18
      %p143 = scmp.lt.s32.totalorder %s18, 5
      %p144 = pnand %p142, %p143
      %p145 = pneg %p144
      // Predicated region
      $region9: #{_mlp_pallas.1} parent=5 // pred_check
        _
      $region10: #{_mlp_pallas.1} parent=5 // pred_check_branch
        %147 = sbr.rel (%p144) target = $region12
      $region11: #{_mlp_pallas.1} parent=5 // pred_region
        %s148 = ssub.s32 %s18, 1
      $region12: #{_mlp_pallas.1} parent=5 // pred_fallthru
        _
      %p149 = scmp.lt.s32.totalorder %s18, 4
      // Predicated region
      $region13: #{_mlp_pallas.1} parent=5 // pred_check
        %p150 = pneg %p149
      $region14: #{_mlp_pallas.1} parent=5 // pred_check_branch
        %152 = sbr.rel (%p150) target = $region16
      $region15: #{_mlp_pallas.1} parent=5 // pred_region
        // Predicated region
        $region17: #{_mlp_pallas.1} parent=15 // pred_check
          %p153 = pneg %p50
        $region18: #{_mlp_pallas.1} parent=15 // pred_check_branch
          %155 = sbr.rel (%p153) target = $region20
        $region19: #{_mlp_pallas.1} parent=15 // pred_region
          %s156 = sand.u32 %s40, 1
          %s157 = scalar_lea.sflag [#allocation4], %s156
          %s158 = sand.u32 %s40, 1
          %s159 = smul.addr %s158, 64
          %s160 = scalar_lea.vmem [#allocation3], %s159
          %s161 = smul.u32 8, %s25
          %s163 = ssub.s32 1024, 1024
          %164 = vsyncadd %s157, %s163
          %s165 = smul.addr %s161, 2
          %s166 = smul.addr %s165, 64
          %s167 = scalar_lea.hbm %s0, %s166
          %s168 = sshll.u32 %s160, 4
          %s169 = int_to_ptr.vmem [resolvable:$true] %s168
          %174 = dma.hbm_to_vmem [thread:$0]  %s167, 1024, %s169, %s157, 128, 128, 8
        $region20: #{_mlp_pallas.1} parent=15 // pred_fallthru
          _
        // Predicated region
        $region21: #{_mlp_pallas.1} parent=15 // pred_check
          %p175 = pneg %p76
        $region22: #{_mlp_pallas.1} parent=15 // pred_check_branch
          %177 = sbr.rel (%p175) target = $region24
        $region23: #{_mlp_pallas.1} parent=15 // pred_region
          %s178 = sand.u32 %s18, 1
          %s179 = scalar_lea.sflag [#allocation7], %s178
          %s180 = sand.u32 %s66, 1
          %s181 = smul.addr %s180, 512
          %s182 = scalar_lea.vmem [#allocation6], %s181
          %s183 = smul.u32 2, %s26
          %s185 = ssub.s32 8192, 8192
          %186 = vsyncadd %s179, %s185
          %s187 = smul.addr %s183, 64
          %s188 = scalar_lea.hbm %s1, %s187
          %s189 = sshll.u32 %s182, 4
          %s190 = int_to_ptr.vmem [resolvable:$true] %s189
          %195 = dma.hbm_to_vmem [thread:$0]  %s188, 8192, %s190, %s179, 256, 128, 8
        $region24: #{_mlp_pallas.1} parent=15 // pred_fallthru
          _
        // Predicated region
        $region25: #{_mlp_pallas.1} parent=15 // pred_check
          %p196 = pneg %p102
        $region26: #{_mlp_pallas.1} parent=15 // pred_check_branch
          %198 = sbr.rel (%p196) target = $region28
        $region27: #{_mlp_pallas.1} parent=15 // pred_region
          %s199 = sand.u32 %s18, 1
          %s200 = scalar_lea.sflag [#allocation7], %s199
          %s201 = sand.u32 %s92, 1
          %s202 = smul.addr %s201, 256
          %s203 = scalar_lea.vmem [#allocation8], %s202
          %s204 = smul.u32 32, %s26
          %s206 = ssub.s32 4096, 4096
          %207 = vsyncadd %s200, %s206
          %s208 = smul.addr %s204, 2
          %s209 = smul.addr %s208, 64
          %s210 = scalar_lea.hbm %s2, %s209
          %s211 = sshll.u32 %s203, 4
          %s212 = int_to_ptr.vmem [resolvable:$true] %s211
          %217 = dma.hbm_to_vmem [thread:$0]  %s210, 4096, %s212, %s200, 128, 128, 8
        $region28: #{_mlp_pallas.1} parent=15 // pred_fallthru
          _
      $region16: #{_mlp_pallas.1} parent=5 // pred_fallthru
        _
      %p218 = scmp.le.s32.totalorder 1, %s18
      %p219 = scmp.lt.s32.totalorder %s18, 5
      %p220 = pnand %p218, %p219
      %p221 = pneg %p220
      // Predicated region
      $region29: #{_mlp_pallas.1} parent=5 // pred_check
        _
      $region30: #{_mlp_pallas.1} parent=5 // pred_check_branch
        %223 = sbr.rel (%p220) target = $region32
      $region31: #{_mlp_pallas.1} parent=5 // pred_region
        %s224 = ssub.s32 %s18, 1
        %s225 = sand.u32 %s43, 1
        %s226 = scalar_lea.sflag [#allocation4], %s225
        %s227 = sand.u32 %s43, 1
        %s228 = smul.addr %s227, 64
        %s229 = scalar_lea.vmem [#allocation3], %s228
        // Predicated region
        $region33: #{_mlp_pallas.1} parent=31 // pred_check
          %p230 = pneg %p56
        $region34: #{_mlp_pallas.1} parent=31 // pred_check_branch
          %232 = sbr.rel (%p230) target = $region36
        $region35: #{_mlp_pallas.1} parent=31 // pred_region
          %233 = dma.done %s226, 1024
        $region36: #{_mlp_pallas.1} parent=31 // pred_fallthru
          _
        %s234 = sand.u32 %s23, 1
        %s235 = scalar_lea.sflag [#allocation7], %s234
        %s236 = sand.u32 %s69, 1
        %s237 = smul.addr %s236, 512
        %s238 = scalar_lea.vmem [#allocation6], %s237
        // Predicated region
        $region37: #{_mlp_pallas.1} parent=31 // pred_check
          %p239 = pneg %p82
        $region38: #{_mlp_pallas.1} parent=31 // pred_check_branch
          %241 = sbr.rel (%p239) target = $region40
        $region39: #{_mlp_pallas.1} parent=31 // pred_region
          %242 = dma.done %s235, 8192
        $region40: #{_mlp_pallas.1} parent=31 // pred_fallthru
          _
        %s243 = sand.u32 %s23, 1
        %s244 = scalar_lea.sflag [#allocation7], %s243
        %s245 = sand.u32 %s95, 1
        %s246 = smul.addr %s245, 256
        %s247 = scalar_lea.vmem [#allocation8], %s246
        // Predicated region
        $region41: #{_mlp_pallas.1} parent=31 // pred_check
          %p248 = pneg %p108
        $region42: #{_mlp_pallas.1} parent=31 // pred_check_branch
          %250 = sbr.rel (%p248) target = $region44
        $region43: #{_mlp_pallas.1} parent=31 // pred_region
          %251 = dma.done %s244, 4096
        $region44: #{_mlp_pallas.1} parent=31 // pred_fallthru
          _
        %s252 = sand.u32 %s43, 1
        %s253 = scalar_lea.sflag [#allocation4], %s252
        %s254 = sand.u32 %s43, 1
        %s255 = smul.addr %s254, 64
        %s256 = scalar_lea.vmem [#allocation3], %s255
        %p257 = pneg %p56
        %p258 = pneg %p53
        %s259 = sand.u32 %s23, 1
        %s260 = scalar_lea.sflag [#allocation7], %s259
        %s261 = sand.u32 %s69, 1
        %s262 = smul.addr %s261, 512
        %s263 = scalar_lea.vmem [#allocation6], %s262
        %p264 = pneg %p82
        %p265 = pneg %p79
        %s266 = sand.u32 %s23, 1
        %s267 = scalar_lea.sflag [#allocation7], %s266
        %s268 = sand.u32 %s95, 1
        %s269 = smul.addr %s268, 256
        %s270 = scalar_lea.vmem [#allocation8], %s269
        %p271 = pneg %p108
        %p272 = pneg %p105
        %p273 = pneg %p134
        %p274 = pneg %p131
        %s275 = sand.u32 %s121, 1
        %s276 = scalar_lea.sflag [#allocation5], %s275
        %s277 = sand.u32 %s121, 1
        %s278 = smul.addr %s277, 64
        %s279 = scalar_lea.vmem [#allocation9], %s278
        %s280 = smul.u32 8, %s27
        %s281 = smul.u32 2, %s28
        %s282 = smul.u32 32, %s28
        %s283 = smul.u32 8, %s27
        %p284 = scmp.eq.s32.totalorder %s28, 0
        // Predicated region
        $region45: #{_mlp_pallas.1} parent=31 // pred_check
          %p285 = pneg %p284
        $region46: #{_mlp_pallas.1} parent=31 // pred_check_branch
          %287 = sbr.rel (%p285) target = $region48
        $region47: #{_mlp_pallas.1} parent=31 // pred_region
          %288 = vst [vmem:[#allocation2] sm:$0xff] 0.0
          %289 = vst [vmem:[#allocation2 + $0x8] sm:$0xff] 0.0
          %290 = vst [vmem:[#allocation2 + $0x10] sm:$0xff] 0.0
          %291 = vst [vmem:[#allocation2 + $0x18] sm:$0xff] 0.0
          %292 = vst [vmem:[#allocation2 + $0x20] sm:$0xff] 0.0
          %293 = vst [vmem:[#allocation2 + $0x28] sm:$0xff] 0.0
          %294 = vst [vmem:[#allocation2 + $0x30] sm:$0xff] 0.0
          %295 = vst [vmem:[#allocation2 + $0x38] sm:$0xff] 0.0
          %296 = vst [vmem:[#allocation2 + $0x40] sm:$0xff] 0.0
          %297 = vst [vmem:[#allocation2 + $0x48] sm:$0xff] 0.0
          %298 = vst [vmem:[#allocation2 + $0x50] sm:$0xff] 0.0
          %299 = vst [vmem:[#allocation2 + $0x58] sm:$0xff] 0.0
          %300 = vst [vmem:[#allocation2 + $0x60] sm:$0xff] 0.0
          %301 = vst [vmem:[#allocation2 + $0x68] sm:$0xff] 0.0
          %302 = vst [vmem:[#allocation2 + $0x70] sm:$0xff] 0.0
          %303 = vst [vmem:[#allocation2 + $0x78] sm:$0xff] 0.0
        $region48: #{_mlp_pallas.1} parent=31 // pred_fallthru
          _
        %v304 = vld [vmem:[%s229] sm:$0xff]
        %v305 = vld [vmem:[%s229 + $0x8] sm:$0xff]
        %v306 = vld [vmem:[%s229 + $0x10] sm:$0xff]
        %v307 = vld [vmem:[%s229 + $0x18] sm:$0xff]
        %v308 = vld [vmem:[%s229 + $0x20] sm:$0xff]
        %v309 = vld [vmem:[%s229 + $0x28] sm:$0xff]
        %v310 = vld [vmem:[%s229 + $0x30] sm:$0xff]
        %v311 = vld [vmem:[%s229 + $0x38] sm:$0xff]
        %v312 = vld [vmem:[%s238] sm:$0xff]
        %v313 = vld [vmem:[%s238 + $0x8] sm:$0xff]
        %v314 = vld [vmem:[%s238 + $0x10] sm:$0xff]
        %v315 = vld [vmem:[%s238 + $0x18] sm:$0xff]
        %v316 = vld [vmem:[%s238 + $0x20] sm:$0xff]
        %v317 = vld [vmem:[%s238 + $0x28] sm:$0xff]
        %v318 = vld [vmem:[%s238 + $0x30] sm:$0xff]
        %v319 = vld [vmem:[%s238 + $0x38] sm:$0xff]
        %v320 = vld [vmem:[%s238 + $0x40] sm:$0xff]
        %v321 = vld [vmem:[%s238 + $0x48] sm:$0xff]
        %v322 = vld [vmem:[%s238 + $0x50] sm:$0xff]
        %v323 = vld [vmem:[%s238 + $0x58] sm:$0xff]
        %v324 = vld [vmem:[%s238 + $0x60] sm:$0xff]
        %v325 = vld [vmem:[%s238 + $0x68] sm:$0xff]
        %v326 = vld [vmem:[%s238 + $0x70] sm:$0xff]
        %v327 = vld [vmem:[%s238 + $0x78] sm:$0xff]
        %v328 = vld [vmem:[%s238 + $0x80] sm:$0xff]
        %v329 = vld [vmem:[%s238 + $0x88] sm:$0xff]
        %v330 = vld [vmem:[%s238 + $0x90] sm:$0xff]
        %v331 = vld [vmem:[%s238 + $0x98] sm:$0xff]
        %v332 = vld [vmem:[%s238 + $0xa0] sm:$0xff]
        %v333 = vld [vmem:[%s238 + $0xa8] sm:$0xff]
        %v334 = vld [vmem:[%s238 + $0xb0] sm:$0xff]
        %v335 = vld [vmem:[%s238 + $0xb8] sm:$0xff]
        %v336 = vld [vmem:[%s238 + $0xc0] sm:$0xff]
        %v337 = vld [vmem:[%s238 + $0xc8] sm:$0xff]
        %v338 = vld [vmem:[%s238 + $0xd0] sm:$0xff]
        %v339 = vld [vmem:[%s238 + $0xd8] sm:$0xff]
        %v340 = vld [vmem:[%s238 + $0xe0] sm:$0xff]
        %v341 = vld [vmem:[%s238 + $0xe8] sm:$0xff]
        %v342 = vld [vmem:[%s238 + $0xf0] sm:$0xff]
        %v343 = vld [vmem:[%s238 + $0xf8] sm:$0xff]
        %v352 = vunpack.c.l.b16 %v304
        %v353 = vunpack.c.h.b16 %v304
        %v354 = vunpack.c.l.b16 %v305
        %v355 = vunpack.c.h.b16 %v305
        %v356 = vunpack.c.l.b16 %v306
        %v357 = vunpack.c.h.b16 %v306
        %v358 = vunpack.c.l.b16 %v307
        %v359 = vunpack.c.h.b16 %v307
        %v360 = vunpack.c.l.b16 %v308
        %v361 = vunpack.c.h.b16 %v308
        %v362 = vunpack.c.l.b16 %v309
        %v363 = vunpack.c.h.b16 %v309
        %v364 = vunpack.c.l.b16 %v310
        %v365 = vunpack.c.h.b16 %v310
        %v366 = vunpack.c.l.b16 %v311
        %v367 = vunpack.c.h.b16 %v311
        %v368 = vpack.c.b16 %v354, %v352
        %v369 = vpack.c.b16 %v355, %v353
        %v370 = vpack.c.b16 %v358, %v356
        %v371 = vpack.c.b16 %v359, %v357
        %v372 = vpack.c.b16 %v362, %v360
        %v373 = vpack.c.b16 %v363, %v361
        %v374 = vpack.c.b16 %v366, %v364
        %v375 = vpack.c.b16 %v367, %v365
        %v416 = vunpack.c.l.b16 %v312
        %v417 = vunpack.c.h.b16 %v312
        %v418 = vunpack.c.l.b16 %v313
        %v419 = vunpack.c.h.b16 %v313
        %v420 = vunpack.c.l.b16 %v314
        %v421 = vunpack.c.h.b16 %v314
        %v422 = vunpack.c.l.b16 %v315
        %v423 = vunpack.c.h.b16 %v315
        %v424 = vunpack.c.l.b16 %v316
        %v425 = vunpack.c.h.b16 %v316
        %v426 = vunpack.c.l.b16 %v317
        %v427 = vunpack.c.h.b16 %v317
        %v428 = vunpack.c.l.b16 %v318
        %v429 = vunpack.c.h.b16 %v318
        %v430 = vunpack.c.l.b16 %v319
        %v431 = vunpack.c.h.b16 %v319
        %v432 = vunpack.c.l.b16 %v320
        %v433 = vunpack.c.h.b16 %v320
        %v434 = vunpack.c.l.b16 %v321
        %v435 = vunpack.c.h.b16 %v321
        %v436 = vunpack.c.l.b16 %v322
        %v437 = vunpack.c.h.b16 %v322
        %v438 = vunpack.c.l.b16 %v323
        %v439 = vunpack.c.h.b16 %v323
        %v440 = vunpack.c.l.b16 %v324
        %v441 = vunpack.c.h.b16 %v324
        %v442 = vunpack.c.l.b16 %v325
        %v443 = vunpack.c.h.b16 %v325
        %v444 = vunpack.c.l.b16 %v326
        %v445 = vunpack.c.h.b16 %v326
        %v446 = vunpack.c.l.b16 %v327
        %v447 = vunpack.c.h.b16 %v327
        %v448 = vunpack.c.l.b16 %v328
        %v449 = vunpack.c.h.b16 %v328
        %v450 = vunpack.c.l.b16 %v329
        %v451 = vunpack.c.h.b16 %v329
        %v452 = vunpack.c.l.b16 %v330
        %v453 = vunpack.c.h.b16 %v330
        %v454 = vunpack.c.l.b16 %v331
        %v455 = vunpack.c.h.b16 %v331
        %v456 = vunpack.c.l.b16 %v332
        %v457 = vunpack.c.h.b16 %v332
        %v458 = vunpack.c.l.b16 %v333
        %v459 = vunpack.c.h.b16 %v333
        %v460 = vunpack.c.l.b16 %v334
        %v461 = vunpack.c.h.b16 %v334
        %v462 = vunpack.c.l.b16 %v335
        %v463 = vunpack.c.h.b16 %v335
        %v464 = vunpack.c.l.b16 %v336
        %v465 = vunpack.c.h.b16 %v336
        %v466 = vunpack.c.l.b16 %v337
        %v467 = vunpack.c.h.b16 %v337
        %v468 = vunpack.c.l.b16 %v338
        %v469 = vunpack.c.h.b16 %v338
        %v470 = vunpack.c.l.b16 %v339
        %v471 = vunpack.c.h.b16 %v339
        %v472 = vunpack.c.l.b16 %v340
        %v473 = vunpack.c.h.b16 %v340
        %v474 = vunpack.c.l.b16 %v341
        %v475 = vunpack.c.h.b16 %v341
        %v476 = vunpack.c.l.b16 %v342
        %v477 = vunpack.c.h.b16 %v342
        %v478 = vunpack.c.l.b16 %v343
        %v479 = vunpack.c.h.b16 %v343
        %v480 = vpack.c.b16 %v418, %v416
        %v481 = vpack.c.b16 %v419, %v417
        %v482 = vpack.c.b16 %v422, %v420
        %v483 = vpack.c.b16 %v423, %v421
        %v484 = vpack.c.b16 %v426, %v424
        %v485 = vpack.c.b16 %v427, %v425
        %v486 = vpack.c.b16 %v430, %v428
        %v487 = vpack.c.b16 %v431, %v429
        %v488 = vpack.c.b16 %v434, %v432
        %v489 = vpack.c.b16 %v435, %v433
        %v490 = vpack.c.b16 %v438, %v436
        %v491 = vpack.c.b16 %v439, %v437
        %v492 = vpack.c.b16 %v442, %v440
        %v493 = vpack.c.b16 %v443, %v441
        %v494 = vpack.c.b16 %v446, %v444
        %v495 = vpack.c.b16 %v447, %v445
        %v496 = vpack.c.b16 %v450, %v448
        %v497 = vpack.c.b16 %v451, %v449
        %v498 = vpack.c.b16 %v454, %v452
        %v499 = vpack.c.b16 %v455, %v453
        %v500 = vpack.c.b16 %v458, %v456
        %v501 = vpack.c.b16 %v459, %v457
        %v502 = vpack.c.b16 %v462, %v460
        %v503 = vpack.c.b16 %v463, %v461
        %v504 = vpack.c.b16 %v466, %v464
        %v505 = vpack.c.b16 %v467, %v465
        %v506 = vpack.c.b16 %v470, %v468
        %v507 = vpack.c.b16 %v471, %v469
        %v508 = vpack.c.b16 %v474, %v472
        %v509 = vpack.c.b16 %v475, %v473
        %v510 = vpack.c.b16 %v478, %v476
        %v511 = vpack.c.b16 %v479, %v477
        %544 = vmatprep.subr.bf16.mxu0 %v495
        %545 = vmatpush1.bf16.msra.mxu0 %v494
        %546 = vmatprep.subr.bf16.mxu0 %v493
        %547 = vmatpush1.bf16.msra.mxu0 %v492
        %548 = vmatprep.subr.bf16.mxu0 %v491
        %549 = vmatpush1.bf16.msra.mxu0 %v490
        %550 = vmatprep.subr.bf16.mxu0 %v489
        %551 = vmatpush1.bf16.msra.mxu0 %v488
        %552 = vmatprep.subr.bf16.mxu0 %v487
        %553 = vmatpush1.bf16.msra.mxu0 %v486
        %554 = vmatprep.subr.bf16.mxu0 %v485
        %555 = vmatpush1.bf16.msra.mxu0 %v484
        %556 = vmatprep.subr.bf16.mxu0 %v483
        %557 = vmatpush1.bf16.msra.mxu0 %v482
        %558 = vmatprep.subr.bf16.mxu0 %v481
        %559 = vmatpush1.bf16.msra.mxu0 %v480
        %560 = vmatprep.subr.bf16.mxu0 %v511
        %561 = vmatpush2.bf16.msra.mxu0 %v510
        %562 = vmatprep.subr.bf16.mxu0 %v509
        %563 = vmatpush2.bf16.msra.mxu0 %v508
        %564 = vmatprep.subr.bf16.mxu0 %v507
        %565 = vmatpush2.bf16.msra.mxu0 %v506
        %566 = vmatprep.subr.bf16.mxu0 %v505
        %567 = vmatpush2.bf16.msra.mxu0 %v504
        %568 = vmatprep.subr.bf16.mxu0 %v503
        %569 = vmatpush2.bf16.msra.mxu0 %v502
        %570 = vmatprep.subr.bf16.mxu0 %v501
        %571 = vmatpush2.bf16.msra.mxu0 %v500
        %572 = vmatprep.subr.bf16.mxu0 %v499
        %573 = vmatpush2.bf16.msra.mxu0 %v498
        %574 = vmatprep.subr.bf16.mxu0 %v497
        %575 = vmatpush2.bf16.msra.mxu0 %v496
        %576 = vmatprep.mubr.bf16.mxu0 %v369
        %577 = vmatmul.mubr.bf16.gmra.mxu0 %v368
        %v578 = vpop.f32.mrf.mxu0
        %v579 = vadd.f32 0.0, %v578
        %v580 = vpop.f32.mrf.mxu0
        %v581 = vadd.f32 0.0, %v580
        %v582 = vpop.f32.mrf.mxu0
        %v583 = vadd.f32 0.0, %v582
        %v584 = vpop.f32.mrf.mxu0
        %v585 = vadd.f32 0.0, %v584
        %586 = vmatprep.mubr.bf16.mxu0 %v371
        %587 = vmatmul.mubr.bf16.gmra.mxu0 %v370
        %v588 = vpop.f32.mrf.mxu0
        %v589 = vadd.f32 0.0, %v588
        %v590 = vpop.f32.mrf.mxu0
        %v591 = vadd.f32 0.0, %v590
        %v592 = vpop.f32.mrf.mxu0
        %v593 = vadd.f32 0.0, %v592
        %v594 = vpop.f32.mrf.mxu0
        %v595 = vadd.f32 0.0, %v594
        %596 = vmatprep.mubr.bf16.mxu0 %v373
        %597 = vmatmul.mubr.bf16.gmra.mxu0 %v372
        %v598 = vpop.f32.mrf.mxu0
        %v599 = vadd.f32 0.0, %v598
        %v600 = vpop.f32.mrf.mxu0
        %v601 = vadd.f32 0.0, %v600
        %v602 = vpop.f32.mrf.mxu0
        %v603 = vadd.f32 0.0, %v602
        %v604 = vpop.f32.mrf.mxu0
        %v605 = vadd.f32 0.0, %v604
        %606 = vmatprep.mubr.bf16.mxu0 %v375
        %607 = vmatmul.mubr.bf16.gmra.mxu0 %v374
        %v608 = vpop.f32.mrf.mxu0
        %v609 = vadd.f32 0.0, %v608
        %v610 = vpop.f32.mrf.mxu0
        %v611 = vadd.f32 0.0, %v610
        %v612 = vpop.f32.mrf.mxu0
        %v613 = vadd.f32 0.0, %v612
        %v614 = vpop.f32.mrf.mxu0
        %v615 = vadd.f32 0.0, %v614
        %616 = vdwg.mxu0
        %s617 = scalar_lea.vmem %s238, 256 [#allocation6]
        %v618 = vld [vmem:[%s617] sm:$0xff]
        %v619 = vld [vmem:[%s617 + $0x8] sm:$0xff]
        %v620 = vld [vmem:[%s617 + $0x10] sm:$0xff]
        %v621 = vld [vmem:[%s617 + $0x18] sm:$0xff]
        %v622 = vld [vmem:[%s617 + $0x20] sm:$0xff]
        %v623 = vld [vmem:[%s617 + $0x28] sm:$0xff]
        %v624 = vld [vmem:[%s617 + $0x30] sm:$0xff]
        %v625 = vld [vmem:[%s617 + $0x38] sm:$0xff]
        %v626 = vld [vmem:[%s617 + $0x40] sm:$0xff]
        %v627 = vld [vmem:[%s617 + $0x48] sm:$0xff]
        %v628 = vld [vmem:[%s617 + $0x50] sm:$0xff]
        %v629 = vld [vmem:[%s617 + $0x58] sm:$0xff]
        %v630 = vld [vmem:[%s617 + $0x60] sm:$0xff]
        %v631 = vld [vmem:[%s617 + $0x68] sm:$0xff]
        %v632 = vld [vmem:[%s617 + $0x70] sm:$0xff]
        %v633 = vld [vmem:[%s617 + $0x78] sm:$0xff]
        %v634 = vld [vmem:[%s617 + $0x80] sm:$0xff]
        %v635 = vld [vmem:[%s617 + $0x88] sm:$0xff]
        %v636 = vld [vmem:[%s617 + $0x90] sm:$0xff]
        %v637 = vld [vmem:[%s617 + $0x98] sm:$0xff]
        %v638 = vld [vmem:[%s617 + $0xa0] sm:$0xff]
        %v639 = vld [vmem:[%s617 + $0xa8] sm:$0xff]
        %v640 = vld [vmem:[%s617 + $0xb0] sm:$0xff]
        %v641 = vld [vmem:[%s617 + $0xb8] sm:$0xff]
        %v642 = vld [vmem:[%s617 + $0xc0] sm:$0xff]
        %v643 = vld [vmem:[%s617 + $0xc8] sm:$0xff]
        %v644 = vld [vmem:[%s617 + $0xd0] sm:$0xff]
        %v645 = vld [vmem:[%s617 + $0xd8] sm:$0xff]
        %v646 = vld [vmem:[%s617 + $0xe0] sm:$0xff]
        %v647 = vld [vmem:[%s617 + $0xe8] sm:$0xff]
        %v648 = vld [vmem:[%s617 + $0xf0] sm:$0xff]
        %v649 = vld [vmem:[%s617 + $0xf8] sm:$0xff]
        %v682 = vunpack.c.l.b16 %v618
        %v683 = vunpack.c.h.b16 %v618
        %v684 = vunpack.c.l.b16 %v619
        %v685 = vunpack.c.h.b16 %v619
        %v686 = vunpack.c.l.b16 %v620
        %v687 = vunpack.c.h.b16 %v620
        %v688 = vunpack.c.l.b16 %v621
        %v689 = vunpack.c.h.b16 %v621
        %v690 = vunpack.c.l.b16 %v622
        %v691 = vunpack.c.h.b16 %v622
        %v692 = vunpack.c.l.b16 %v623
        %v693 = vunpack.c.h.b16 %v623
        %v694 = vunpack.c.l.b16 %v624
        %v695 = vunpack.c.h.b16 %v624
        %v696 = vunpack.c.l.b16 %v625
        %v697 = vunpack.c.h.b16 %v625
        %v698 = vunpack.c.l.b16 %v626
        %v699 = vunpack.c.h.b16 %v626
        %v700 = vunpack.c.l.b16 %v627
        %v701 = vunpack.c.h.b16 %v627
        %v702 = vunpack.c.l.b16 %v628
        %v703 = vunpack.c.h.b16 %v628
        %v704 = vunpack.c.l.b16 %v629
        %v705 = vunpack.c.h.b16 %v629
        %v706 = vunpack.c.l.b16 %v630
        %v707 = vunpack.c.h.b16 %v630
        %v708 = vunpack.c.l.b16 %v631
        %v709 = vunpack.c.h.b16 %v631
        %v710 = vunpack.c.l.b16 %v632
        %v711 = vunpack.c.h.b16 %v632
        %v712 = vunpack.c.l.b16 %v633
        %v713 = vunpack.c.h.b16 %v633
        %v714 = vunpack.c.l.b16 %v634
        %v715 = vunpack.c.h.b16 %v634
        %v716 = vunpack.c.l.b16 %v635
        %v717 = vunpack.c.h.b16 %v635
        %v718 = vunpack.c.l.b16 %v636
        %v719 = vunpack.c.h.b16 %v636
        %v720 = vunpack.c.l.b16 %v637
        %v721 = vunpack.c.h.b16 %v637
        %v722 = vunpack.c.l.b16 %v638
        %v723 = vunpack.c.h.b16 %v638
        %v724 = vunpack.c.l.b16 %v639
        %v725 = vunpack.c.h.b16 %v639
        %v726 = vunpack.c.l.b16 %v640
        %v727 = vunpack.c.h.b16 %v640
        %v728 = vunpack.c.l.b16 %v641
        %v729 = vunpack.c.h.b16 %v641
        %v730 = vunpack.c.l.b16 %v642
        %v731 = vunpack.c.h.b16 %v642
        %v732 = vunpack.c.l.b16 %v643
        %v733 = vunpack.c.h.b16 %v643
        %v734 = vunpack.c.l.b16 %v644
        %v735 = vunpack.c.h.b16 %v644
        %v736 = vunpack.c.l.b16 %v645
        %v737 = vunpack.c.h.b16 %v645
        %v738 = vunpack.c.l.b16 %v646
        %v739 = vunpack.c.h.b16 %v646
        %v740 = vunpack.c.l.b16 %v647
        %v741 = vunpack.c.h.b16 %v647
        %v742 = vunpack.c.l.b16 %v648
        %v743 = vunpack.c.h.b16 %v648
        %v744 = vunpack.c.l.b16 %v649
        %v745 = vunpack.c.h.b16 %v649
        %v746 = vpack.c.b16 %v684, %v682
        %v747 = vpack.c.b16 %v685, %v683
        %v748 = vpack.c.b16 %v688, %v686
        %v749 = vpack.c.b16 %v689, %v687
        %v750 = vpack.c.b16 %v692, %v690
        %v751 = vpack.c.b16 %v693, %v691
        %v752 = vpack.c.b16 %v696, %v694
        %v753 = vpack.c.b16 %v697, %v695
        %v754 = vpack.c.b16 %v700, %v698
        %v755 = vpack.c.b16 %v701, %v699
        %v756 = vpack.c.b16 %v704, %v702
        %v757 = vpack.c.b16 %v705, %v703
        %v758 = vpack.c.b16 %v708, %v706
        %v759 = vpack.c.b16 %v709, %v707
        %v760 = vpack.c.b16 %v712, %v710
        %v761 = vpack.c.b16 %v713, %v711
        %v762 = vpack.c.b16 %v716, %v714
        %v763 = vpack.c.b16 %v717, %v715
        %v764 = vpack.c.b16 %v720, %v718
        %v765 = vpack.c.b16 %v721, %v719
        %v766 = vpack.c.b16 %v724, %v722
        %v767 = vpack.c.b16 %v725, %v723
        %v768 = vpack.c.b16 %v728, %v726
        %v769 = vpack.c.b16 %v729, %v727
        %v770 = vpack.c.b16 %v732, %v730
        %v771 = vpack.c.b16 %v733, %v731
        %v772 = vpack.c.b16 %v736, %v734
        %v773 = vpack.c.b16 %v737, %v735
        %v774 = vpack.c.b16 %v740, %v738
        %v775 = vpack.c.b16 %v741, %v739
        %v776 = vpack.c.b16 %v744, %v742
        %v777 = vpack.c.b16 %v745, %v743
        %810 = vmatprep.subr.bf16.mxu0 %v761
        %811 = vmatpush1.bf16.msra.mxu0 %v760
        %812 = vmatprep.subr.bf16.mxu0 %v759
        %813 = vmatpush1.bf16.msra.mxu0 %v758
        %814 = vmatprep.subr.bf16.mxu0 %v757
        %815 = vmatpush1.bf16.msra.mxu0 %v756
        %816 = vmatprep.subr.bf16.mxu0 %v755
        %817 = vmatpush1.bf16.msra.mxu0 %v754
        %818 = vmatprep.subr.bf16.mxu0 %v753
        %819 = vmatpush1.bf16.msra.mxu0 %v752
        %820 = vmatprep.subr.bf16.mxu0 %v751
        %821 = vmatpush1.bf16.msra.mxu0 %v750
        %822 = vmatprep.subr.bf16.mxu0 %v749
        %823 = vmatpush1.bf16.msra.mxu0 %v748
        %824 = vmatprep.subr.bf16.mxu0 %v747
        %825 = vmatpush1.bf16.msra.mxu0 %v746
        %826 = vmatprep.subr.bf16.mxu0 %v777
        %827 = vmatpush2.bf16.msra.mxu0 %v776
        %828 = vmatprep.subr.bf16.mxu0 %v775
        %829 = vmatpush2.bf16.msra.mxu0 %v774
        %830 = vmatprep.subr.bf16.mxu0 %v773
        %831 = vmatpush2.bf16.msra.mxu0 %v772
        %832 = vmatprep.subr.bf16.mxu0 %v771
        %833 = vmatpush2.bf16.msra.mxu0 %v770
        %834 = vmatprep.subr.bf16.mxu0 %v769
        %835 = vmatpush2.bf16.msra.mxu0 %v768
        %836 = vmatprep.subr.bf16.mxu0 %v767
        %837 = vmatpush2.bf16.msra.mxu0 %v766
        %838 = vmatprep.subr.bf16.mxu0 %v765
        %839 = vmatpush2.bf16.msra.mxu0 %v764
        %840 = vmatprep.subr.bf16.mxu0 %v763
        %841 = vmatpush2.bf16.msra.mxu0 %v762
        %842 = vmatprep.mubr.bf16.mxu0 %v369
        %843 = vmatmul.mubr.bf16.gmra.mxu0 %v368
        %v844 = vpop.f32.mrf.mxu0
        %v845 = vadd.f32 0.0, %v844
        %v846 = vpop.f32.mrf.mxu0
        %v847 = vadd.f32 0.0, %v846
        %v848 = vpop.f32.mrf.mxu0
        %v849 = vadd.f32 0.0, %v848
        %v850 = vpop.f32.mrf.mxu0
        %v851 = vadd.f32 0.0, %v850
        %852 = vmatprep.mubr.bf16.mxu0 %v371
        %853 = vmatmul.mubr.bf16.gmra.mxu0 %v370
        %v854 = vpop.f32.mrf.mxu0
        %v855 = vadd.f32 0.0, %v854
        %v856 = vpop.f32.mrf.mxu0
        %v857 = vadd.f32 0.0, %v856
        %v858 = vpop.f32.mrf.mxu0
        %v859 = vadd.f32 0.0, %v858
        %v860 = vpop.f32.mrf.mxu0
        %v861 = vadd.f32 0.0, %v860
        %862 = vmatprep.mubr.bf16.mxu0 %v373
        %863 = vmatmul.mubr.bf16.gmra.mxu0 %v372
        %v864 = vpop.f32.mrf.mxu0
        %v865 = vadd.f32 0.0, %v864
        %v866 = vpop.f32.mrf.mxu0
        %v867 = vadd.f32 0.0, %v866
        %v868 = vpop.f32.mrf.mxu0
        %v869 = vadd.f32 0.0, %v868
        %v870 = vpop.f32.mrf.mxu0
        %v871 = vadd.f32 0.0, %v870
        %872 = vmatprep.mubr.bf16.mxu0 %v375
        %873 = vmatmul.mubr.bf16.gmra.mxu0 %v374
        %v874 = vpop.f32.mrf.mxu0
        %v875 = vadd.f32 0.0, %v874
        %v876 = vpop.f32.mrf.mxu0
        %v877 = vadd.f32 0.0, %v876
        %v878 = vpop.f32.mrf.mxu0
        %v879 = vadd.f32 0.0, %v878
        %v880 = vpop.f32.mrf.mxu0
        %v881 = vadd.f32 0.0, %v880
        %882 = vdwg.mxu0
        %v883 = vxor.u32 %v579, 2147483648
        %v884 = vxor.u32 %v581, 2147483648
        %v885 = vxor.u32 %v583, 2147483648
        %v886 = vxor.u32 %v585, 2147483648
        %v887 = vxor.u32 %v589, 2147483648
        %v888 = vxor.u32 %v591, 2147483648
        %v889 = vxor.u32 %v593, 2147483648
        %v890 = vxor.u32 %v595, 2147483648
        %v891 = vxor.u32 %v599, 2147483648
        %v892 = vxor.u32 %v601, 2147483648
        %v893 = vxor.u32 %v603, 2147483648
        %v894 = vxor.u32 %v605, 2147483648
        %v895 = vxor.u32 %v609, 2147483648
        %v896 = vxor.u32 %v611, 2147483648
        %v897 = vxor.u32 %v613, 2147483648
        %v898 = vxor.u32 %v615, 2147483648
        %v899 = vmul.f32 %v883, 1.442695
        %v900 = vpow.pop %v899
        %v901 = vmul.f32 %v884, 1.442695
        %v902 = vpow.pop %v901
        %v903 = vmul.f32 %v885, 1.442695
        %v904 = vpow.pop %v903
        %v905 = vmul.f32 %v886, 1.442695
        %v906 = vpow.pop %v905
        %v907 = vmul.f32 %v887, 1.442695
        %v908 = vpow.pop %v907
        %v909 = vmul.f32 %v888, 1.442695
        %v910 = vpow.pop %v909
        %v911 = vmul.f32 %v889, 1.442695
        %v912 = vpow.pop %v911
        %v913 = vmul.f32 %v890, 1.442695
        %v914 = vpow.pop %v913
        %v915 = vmul.f32 %v891, 1.442695
        %v916 = vpow.pop %v915
        %v917 = vmul.f32 %v892, 1.442695
        %v918 = vpow.pop %v917
        %v919 = vmul.f32 %v893, 1.442695
        %v920 = vpow.pop %v919
        %v921 = vmul.f32 %v894, 1.442695
        %v922 = vpow.pop %v921
        %v923 = vmul.f32 %v895, 1.442695
        %v924 = vpow.pop %v923
        %v925 = vmul.f32 %v896, 1.442695
        %v926 = vpow.pop %v925
        %v927 = vmul.f32 %v897, 1.442695
        %v928 = vpow.pop %v927
        %v929 = vmul.f32 %v898, 1.442695
        %v930 = vpow.pop %v929
        %v931 = vadd.f32 %v900, 1.0
        %v932 = vadd.f32 %v902, 1.0
        %v933 = vadd.f32 %v904, 1.0
        %v934 = vadd.f32 %v906, 1.0
        %v935 = vadd.f32 %v908, 1.0
        %v936 = vadd.f32 %v910, 1.0
        %v937 = vadd.f32 %v912, 1.0
        %v938 = vadd.f32 %v914, 1.0
        %v939 = vadd.f32 %v916, 1.0
        %v940 = vadd.f32 %v918, 1.0
        %v941 = vadd.f32 %v920, 1.0
        %v942 = vadd.f32 %v922, 1.0
        %v943 = vadd.f32 %v924, 1.0
        %v944 = vadd.f32 %v926, 1.0
        %v945 = vadd.f32 %v928, 1.0
        %v946 = vadd.f32 %v930, 1.0
        %v947 = vrcp.pop %v931
        %v948 = vmul.f32 1.0, %v947
        %v949 = vrcp.pop %v932
        %v950 = vmul.f32 1.0, %v949
        %v951 = vrcp.pop %v933
        %v952 = vmul.f32 1.0, %v951
        %v953 = vrcp.pop %v934
        %v954 = vmul.f32 1.0, %v953
        %v955 = vrcp.pop %v935
        %v956 = vmul.f32 1.0, %v955
        %v957 = vrcp.pop %v936
        %v958 = vmul.f32 1.0, %v957
        %v959 = vrcp.pop %v937
        %v960 = vmul.f32 1.0, %v959
        %v961 = vrcp.pop %v938
        %v962 = vmul.f32 1.0, %v961
        %v963 = vrcp.pop %v939
        %v964 = vmul.f32 1.0, %v963
        %v965 = vrcp.pop %v940
        %v966 = vmul.f32 1.0, %v965
        %v967 = vrcp.pop %v941
        %v968 = vmul.f32 1.0, %v967
        %v969 = vrcp.pop %v942
        %v970 = vmul.f32 1.0, %v969
        %v971 = vrcp.pop %v943
        %v972 = vmul.f32 1.0, %v971
        %v973 = vrcp.pop %v944
        %v974 = vmul.f32 1.0, %v973
        %v975 = vrcp.pop %v945
        %v976 = vmul.f32 1.0, %v975
        %v977 = vrcp.pop %v946
        %v978 = vmul.f32 1.0, %v977
        %v979 = vmul.f32 %v579, %v948
        %v980 = vmul.f32 %v581, %v950
        %v981 = vmul.f32 %v583, %v952
        %v982 = vmul.f32 %v585, %v954
        %v983 = vmul.f32 %v589, %v956
        %v984 = vmul.f32 %v591, %v958
        %v985 = vmul.f32 %v593, %v960
        %v986 = vmul.f32 %v595, %v962
        %v987 = vmul.f32 %v599, %v964
        %v988 = vmul.f32 %v601, %v966
        %v989 = vmul.f32 %v603, %v968
        %v990 = vmul.f32 %v605, %v970
        %v991 = vmul.f32 %v609, %v972
        %v992 = vmul.f32 %v611, %v974
        %v993 = vmul.f32 %v613, %v976
        %v994 = vmul.f32 %v615, %v978
        %v995 = vmul.f32 %v979, %v845
        %v996 = vmul.f32 %v980, %v847
        %v997 = vmul.f32 %v981, %v849
        %v998 = vmul.f32 %v982, %v851
        %v999 = vmul.f32 %v983, %v855
        %v1000 = vmul.f32 %v984, %v857
        %v1001 = vmul.f32 %v985, %v859
        %v1002 = vmul.f32 %v986, %v861
        %v1003 = vmul.f32 %v987, %v865
        %v1004 = vmul.f32 %v988, %v867
        %v1005 = vmul.f32 %v989, %v869
        %v1006 = vmul.f32 %v990, %v871
        %v1007 = vmul.f32 %v991, %v875
        %v1008 = vmul.f32 %v992, %v877
        %v1009 = vmul.f32 %v993, %v879
        %v1010 = vmul.f32 %v994, %v881
        %v1011 = vld [vmem:[#allocation2] sm:$0xff]
        %v1012 = vld [vmem:[#allocation2 + $0x8] sm:$0xff]
        %v1013 = vld [vmem:[#allocation2 + $0x10] sm:$0xff]
        %v1014 = vld [vmem:[#allocation2 + $0x18] sm:$0xff]
        %v1015 = vld [vmem:[#allocation2 + $0x20] sm:$0xff]
        %v1016 = vld [vmem:[#allocation2 + $0x28] sm:$0xff]
        %v1017 = vld [vmem:[#allocation2 + $0x30] sm:$0xff]
        %v1018 = vld [vmem:[#allocation2 + $0x38] sm:$0xff]
        %v1019 = vld [vmem:[#allocation2 + $0x40] sm:$0xff]
        %v1020 = vld [vmem:[#allocation2 + $0x48] sm:$0xff]
        %v1021 = vld [vmem:[#allocation2 + $0x50] sm:$0xff]
        %v1022 = vld [vmem:[#allocation2 + $0x58] sm:$0xff]
        %v1023 = vld [vmem:[#allocation2 + $0x60] sm:$0xff]
        %v1024 = vld [vmem:[#allocation2 + $0x68] sm:$0xff]
        %v1025 = vld [vmem:[#allocation2 + $0x70] sm:$0xff]
        %v1026 = vld [vmem:[#allocation2 + $0x78] sm:$0xff]
        %v1027 = vpack.c.bf16 %v997, %v995
        %v1028 = vpack.c.bf16 %v998, %v996
        %v1029 = vpack.c.bf16 %v1001, %v999
        %v1030 = vpack.c.bf16 %v1002, %v1000
        %v1031 = vpack.c.bf16 %v1005, %v1003
        %v1032 = vpack.c.bf16 %v1006, %v1004
        %v1033 = vpack.c.bf16 %v1009, %v1007
        %v1034 = vpack.c.bf16 %v1010, %v1008
        %v1035 = vld [vmem:[%s247] sm:$0xff]
        %v1036 = vld [vmem:[%s247 + $0x8] sm:$0xff]
        %v1037 = vld [vmem:[%s247 + $0x10] sm:$0xff]
        %v1038 = vld [vmem:[%s247 + $0x18] sm:$0xff]
        %v1039 = vld [vmem:[%s247 + $0x20] sm:$0xff]
        %v1040 = vld [vmem:[%s247 + $0x28] sm:$0xff]
        %v1041 = vld [vmem:[%s247 + $0x30] sm:$0xff]
        %v1042 = vld [vmem:[%s247 + $0x38] sm:$0xff]
        %v1043 = vld [vmem:[%s247 + $0x40] sm:$0xff]
        %v1044 = vld [vmem:[%s247 + $0x48] sm:$0xff]
        %v1045 = vld [vmem:[%s247 + $0x50] sm:$0xff]
        %v1046 = vld [vmem:[%s247 + $0x58] sm:$0xff]
        %v1047 = vld [vmem:[%s247 + $0x60] sm:$0xff]
        %v1048 = vld [vmem:[%s247 + $0x68] sm:$0xff]
        %v1049 = vld [vmem:[%s247 + $0x70] sm:$0xff]
        %v1050 = vld [vmem:[%s247 + $0x78] sm:$0xff]
        %v1051 = vld [vmem:[%s247 + $0x80] sm:$0xff]
        %v1052 = vld [vmem:[%s247 + $0x88] sm:$0xff]
        %v1053 = vld [vmem:[%s247 + $0x90] sm:$0xff]
        %v1054 = vld [vmem:[%s247 + $0x98] sm:$0xff]
        %v1055 = vld [vmem:[%s247 + $0xa0] sm:$0xff]
        %v1056 = vld [vmem:[%s247 + $0xa8] sm:$0xff]
        %v1057 = vld [vmem:[%s247 + $0xb0] sm:$0xff]
        %v1058 = vld [vmem:[%s247 + $0xb8] sm:$0xff]
        %v1059 = vld [vmem:[%s247 + $0xc0] sm:$0xff]
        %v1060 = vld [vmem:[%s247 + $0xc8] sm:$0xff]
        %v1061 = vld [vmem:[%s247 + $0xd0] sm:$0xff]
        %v1062 = vld [vmem:[%s247 + $0xd8] sm:$0xff]
        %v1063 = vld [vmem:[%s247 + $0xe0] sm:$0xff]
        %v1064 = vld [vmem:[%s247 + $0xe8] sm:$0xff]
        %v1065 = vld [vmem:[%s247 + $0xf0] sm:$0xff]
        %v1066 = vld [vmem:[%s247 + $0xf8] sm:$0xff]
        %v1099 = vunpack.c.l.b16 %v1035
        %v1100 = vunpack.c.h.b16 %v1035
        %v1101 = vunpack.c.l.b16 %v1036
        %v1102 = vunpack.c.h.b16 %v1036
        %v1103 = vunpack.c.l.b16 %v1037
        %v1104 = vunpack.c.h.b16 %v1037
        %v1105 = vunpack.c.l.b16 %v1038
        %v1106 = vunpack.c.h.b16 %v1038
        %v1107 = vunpack.c.l.b16 %v1039
        %v1108 = vunpack.c.h.b16 %v1039
        %v1109 = vunpack.c.l.b16 %v1040
        %v1110 = vunpack.c.h.b16 %v1040
        %v1111 = vunpack.c.l.b16 %v1041
        %v1112 = vunpack.c.h.b16 %v1041
        %v1113 = vunpack.c.l.b16 %v1042
        %v1114 = vunpack.c.h.b16 %v1042
        %v1115 = vunpack.c.l.b16 %v1043
        %v1116 = vunpack.c.h.b16 %v1043
        %v1117 = vunpack.c.l.b16 %v1044
        %v1118 = vunpack.c.h.b16 %v1044
        %v1119 = vunpack.c.l.b16 %v1045
        %v1120 = vunpack.c.h.b16 %v1045
        %v1121 = vunpack.c.l.b16 %v1046
        %v1122 = vunpack.c.h.b16 %v1046
        %v1123 = vunpack.c.l.b16 %v1047
        %v1124 = vunpack.c.h.b16 %v1047
        %v1125 = vunpack.c.l.b16 %v1048
        %v1126 = vunpack.c.h.b16 %v1048
        %v1127 = vunpack.c.l.b16 %v1049
        %v1128 = vunpack.c.h.b16 %v1049
        %v1129 = vunpack.c.l.b16 %v1050
        %v1130 = vunpack.c.h.b16 %v1050
        %v1131 = vunpack.c.l.b16 %v1051
        %v1132 = vunpack.c.h.b16 %v1051
        %v1133 = vunpack.c.l.b16 %v1052
        %v1134 = vunpack.c.h.b16 %v1052
        %v1135 = vunpack.c.l.b16 %v1053
        %v1136 = vunpack.c.h.b16 %v1053
        %v1137 = vunpack.c.l.b16 %v1054
        %v1138 = vunpack.c.h.b16 %v1054
        %v1139 = vunpack.c.l.b16 %v1055
        %v1140 = vunpack.c.h.b16 %v1055
        %v1141 = vunpack.c.l.b16 %v1056
        %v1142 = vunpack.c.h.b16 %v1056
        %v1143 = vunpack.c.l.b16 %v1057
        %v1144 = vunpack.c.h.b16 %v1057
        %v1145 = vunpack.c.l.b16 %v1058
        %v1146 = vunpack.c.h.b16 %v1058
        %v1147 = vunpack.c.l.b16 %v1059
        %v1148 = vunpack.c.h.b16 %v1059
        %v1149 = vunpack.c.l.b16 %v1060
        %v1150 = vunpack.c.h.b16 %v1060
        %v1151 = vunpack.c.l.b16 %v1061
        %v1152 = vunpack.c.h.b16 %v1061
        %v1153 = vunpack.c.l.b16 %v1062
        %v1154 = vunpack.c.h.b16 %v1062
        %v1155 = vunpack.c.l.b16 %v1063
        %v1156 = vunpack.c.h.b16 %v1063
        %v1157 = vunpack.c.l.b16 %v1064
        %v1158 = vunpack.c.h.b16 %v1064
        %v1159 = vunpack.c.l.b16 %v1065
        %v1160 = vunpack.c.h.b16 %v1065
        %v1161 = vunpack.c.l.b16 %v1066
        %v1162 = vunpack.c.h.b16 %v1066
        %v1163 = vpack.c.b16 %v1101, %v1099
        %v1164 = vpack.c.b16 %v1102, %v1100
        %v1165 = vpack.c.b16 %v1105, %v1103
        %v1166 = vpack.c.b16 %v1106, %v1104
        %v1167 = vpack.c.b16 %v1109, %v1107
        %v1168 = vpack.c.b16 %v1110, %v1108
        %v1169 = vpack.c.b16 %v1113, %v1111
        %v1170 = vpack.c.b16 %v1114, %v1112
        %v1171 = vpack.c.b16 %v1117, %v1115
        %v1172 = vpack.c.b16 %v1118, %v1116
        %v1173 = vpack.c.b16 %v1121, %v1119
        %v1174 = vpack.c.b16 %v1122, %v1120
        %v1175 = vpack.c.b16 %v1125, %v1123
        %v1176 = vpack.c.b16 %v1126, %v1124
        %v1177 = vpack.c.b16 %v1129, %v1127
        %v1178 = vpack.c.b16 %v1130, %v1128
        %v1179 = vpack.c.b16 %v1133, %v1131
        %v1180 = vpack.c.b16 %v1134, %v1132
        %v1181 = vpack.c.b16 %v1137, %v1135
        %v1182 = vpack.c.b16 %v1138, %v1136
        %v1183 = vpack.c.b16 %v1141, %v1139
        %v1184 = vpack.c.b16 %v1142, %v1140
        %v1185 = vpack.c.b16 %v1145, %v1143
        %v1186 = vpack.c.b16 %v1146, %v1144
        %v1187 = vpack.c.b16 %v1149, %v1147
        %v1188 = vpack.c.b16 %v1150, %v1148
        %v1189 = vpack.c.b16 %v1153, %v1151
        %v1190 = vpack.c.b16 %v1154, %v1152
        %v1191 = vpack.c.b16 %v1157, %v1155
        %v1192 = vpack.c.b16 %v1158, %v1156
        %v1193 = vpack.c.b16 %v1161, %v1159
        %v1194 = vpack.c.b16 %v1162, %v1160
        %1227 = vmatprep.subr.bf16.mxu0 %v1178
        %1228 = vmatpush1.bf16.msra.mxu0 %v1177
        %1229 = vmatprep.subr.bf16.mxu0 %v1176
        %1230 = vmatpush1.bf16.msra.mxu0 %v1175
        %1231 = vmatprep.subr.bf16.mxu0 %v1174
        %1232 = vmatpush1.bf16.msra.mxu0 %v1173
        %1233 = vmatprep.subr.bf16.mxu0 %v1172
        %1234 = vmatpush1.bf16.msra.mxu0 %v1171
        %1235 = vmatprep.subr.bf16.mxu0 %v1170
        %1236 = vmatpush1.bf16.msra.mxu0 %v1169
        %1237 = vmatprep.subr.bf16.mxu0 %v1168
        %1238 = vmatpush1.bf16.msra.mxu0 %v1167
        %1239 = vmatprep.subr.bf16.mxu0 %v1166
        %1240 = vmatpush1.bf16.msra.mxu0 %v1165
        %1241 = vmatprep.subr.bf16.mxu0 %v1164
        %1242 = vmatpush1.bf16.msra.mxu0 %v1163
        %1243 = vmatprep.subr.bf16.mxu0 %v1194
        %1244 = vmatpush2.bf16.msra.mxu0 %v1193
        %1245 = vmatprep.subr.bf16.mxu0 %v1192
        %1246 = vmatpush2.bf16.msra.mxu0 %v1191
        %1247 = vmatprep.subr.bf16.mxu0 %v1190
        %1248 = vmatpush2.bf16.msra.mxu0 %v1189
        %1249 = vmatprep.subr.bf16.mxu0 %v1188
        %1250 = vmatpush2.bf16.msra.mxu0 %v1187
        %1251 = vmatprep.subr.bf16.mxu0 %v1186
        %1252 = vmatpush2.bf16.msra.mxu0 %v1185
        %1253 = vmatprep.subr.bf16.mxu0 %v1184
        %1254 = vmatpush2.bf16.msra.mxu0 %v1183
        %1255 = vmatprep.subr.bf16.mxu0 %v1182
        %1256 = vmatpush2.bf16.msra.mxu0 %v1181
        %1257 = vmatprep.subr.bf16.mxu0 %v1180
        %1258 = vmatpush2.bf16.msra.mxu0 %v1179
        %1259 = vmatprep.mubr.bf16.mxu0 %v1028
        %1260 = vmatmul.mubr.bf16.gmra.mxu0 %v1027
        %v1261 = vpop.f32.mrf.mxu0
        %v1262 = vadd.f32 0.0, %v1261
        %v1263 = vpop.f32.mrf.mxu0
        %v1264 = vadd.f32 0.0, %v1263
        %v1265 = vpop.f32.mrf.mxu0
        %v1266 = vadd.f32 0.0, %v1265
        %v1267 = vpop.f32.mrf.mxu0
        %v1268 = vadd.f32 0.0, %v1267
        %1269 = vmatprep.mubr.bf16.mxu0 %v1030
        %1270 = vmatmul.mubr.bf16.gmra.mxu0 %v1029
        %v1271 = vpop.f32.mrf.mxu0
        %v1272 = vadd.f32 0.0, %v1271
        %v1273 = vpop.f32.mrf.mxu0
        %v1274 = vadd.f32 0.0, %v1273
        %v1275 = vpop.f32.mrf.mxu0
        %v1276 = vadd.f32 0.0, %v1275
        %v1277 = vpop.f32.mrf.mxu0
        %v1278 = vadd.f32 0.0, %v1277
        %1279 = vmatprep.mubr.bf16.mxu0 %v1032
        %1280 = vmatmul.mubr.bf16.gmra.mxu0 %v1031
        %v1281 = vpop.f32.mrf.mxu0
        %v1282 = vadd.f32 0.0, %v1281
        %v1283 = vpop.f32.mrf.mxu0
        %v1284 = vadd.f32 0.0, %v1283
        %v1285 = vpop.f32.mrf.mxu0
        %v1286 = vadd.f32 0.0, %v1285
        %v1287 = vpop.f32.mrf.mxu0
        %v1288 = vadd.f32 0.0, %v1287
        %1289 = vmatprep.mubr.bf16.mxu0 %v1034
        %1290 = vmatmul.mubr.bf16.gmra.mxu0 %v1033
        %v1291 = vpop.f32.mrf.mxu0
        %v1292 = vadd.f32 0.0, %v1291
        %v1293 = vpop.f32.mrf.mxu0
        %v1294 = vadd.f32 0.0, %v1293
        %v1295 = vpop.f32.mrf.mxu0
        %v1296 = vadd.f32 0.0, %v1295
        %v1297 = vpop.f32.mrf.mxu0
        %v1298 = vadd.f32 0.0, %v1297
        %1299 = vdwg.mxu0
        %v1300 = vadd.f32 %v1011, %v1262
        %v1301 = vadd.f32 %v1012, %v1264
        %v1302 = vadd.f32 %v1013, %v1266
        %v1303 = vadd.f32 %v1014, %v1268
        %v1304 = vadd.f32 %v1015, %v1272
        %v1305 = vadd.f32 %v1016, %v1274
        %v1306 = vadd.f32 %v1017, %v1276
        %v1307 = vadd.f32 %v1018, %v1278
        %v1308 = vadd.f32 %v1019, %v1282
        %v1309 = vadd.f32 %v1020, %v1284
        %v1310 = vadd.f32 %v1021, %v1286
        %v1311 = vadd.f32 %v1022, %v1288
        %v1312 = vadd.f32 %v1023, %v1292
        %v1313 = vadd.f32 %v1024, %v1294
        %v1314 = vadd.f32 %v1025, %v1296
        %v1315 = vadd.f32 %v1026, %v1298
        %1316 = vst [vmem:[#allocation2] sm:$0xff] %v1300
        %1317 = vst [vmem:[#allocation2 + $0x8] sm:$0xff] %v1301
        %1318 = vst [vmem:[#allocation2 + $0x10] sm:$0xff] %v1302
        %1319 = vst [vmem:[#allocation2 + $0x18] sm:$0xff] %v1303
        %1320 = vst [vmem:[#allocation2 + $0x20] sm:$0xff] %v1304
        %1321 = vst [vmem:[#allocation2 + $0x28] sm:$0xff] %v1305
        %1322 = vst [vmem:[#allocation2 + $0x30] sm:$0xff] %v1306
        %1323 = vst [vmem:[#allocation2 + $0x38] sm:$0xff] %v1307
        %1324 = vst [vmem:[#allocation2 + $0x40] sm:$0xff] %v1308
        %1325 = vst [vmem:[#allocation2 + $0x48] sm:$0xff] %v1309
        %1326 = vst [vmem:[#allocation2 + $0x50] sm:$0xff] %v1310
        %1327 = vst [vmem:[#allocation2 + $0x58] sm:$0xff] %v1311
        %1328 = vst [vmem:[#allocation2 + $0x60] sm:$0xff] %v1312
        %1329 = vst [vmem:[#allocation2 + $0x68] sm:$0xff] %v1313
        %1330 = vst [vmem:[#allocation2 + $0x70] sm:$0xff] %v1314
        %1331 = vst [vmem:[#allocation2 + $0x78] sm:$0xff] %v1315
        %p1332 = scmp.eq.s32.totalorder %s28, 1
        // Predicated region
        $region49: #{_mlp_pallas.1} parent=31 // pred_check
          %p1333 = pneg %p1332
        $region50: #{_mlp_pallas.1} parent=31 // pred_check_branch
          %1335 = sbr.rel (%p1333) target = $region52
        $region51: #{_mlp_pallas.1} parent=31 // pred_region
          %v1336 = vld [vmem:[#allocation2] sm:$0xff]
          %v1337 = vld [vmem:[#allocation2 + $0x8] sm:$0xff]
          %v1338 = vld [vmem:[#allocation2 + $0x10] sm:$0xff]
          %v1339 = vld [vmem:[#allocation2 + $0x18] sm:$0xff]
          %v1340 = vld [vmem:[#allocation2 + $0x20] sm:$0xff]
          %v1341 = vld [vmem:[#allocation2 + $0x28] sm:$0xff]
          %v1342 = vld [vmem:[#allocation2 + $0x30] sm:$0xff]
          %v1343 = vld [vmem:[#allocation2 + $0x38] sm:$0xff]
          %v1344 = vld [vmem:[#allocation2 + $0x40] sm:$0xff]
          %v1345 = vld [vmem:[#allocation2 + $0x48] sm:$0xff]
          %v1346 = vld [vmem:[#allocation2 + $0x50] sm:$0xff]
          %v1347 = vld [vmem:[#allocation2 + $0x58] sm:$0xff]
          %v1348 = vld [vmem:[#allocation2 + $0x60] sm:$0xff]
          %v1349 = vld [vmem:[#allocation2 + $0x68] sm:$0xff]
          %v1350 = vld [vmem:[#allocation2 + $0x70] sm:$0xff]
          %v1351 = vld [vmem:[#allocation2 + $0x78] sm:$0xff]
          %v1352 = vpack.c.bf16 %v1338, %v1336
          %v1353 = vpack.c.bf16 %v1339, %v1337
          %v1354 = vpack.c.bf16 %v1342, %v1340
          %v1355 = vpack.c.bf16 %v1343, %v1341
          %v1356 = vpack.c.bf16 %v1346, %v1344
          %v1357 = vpack.c.bf16 %v1347, %v1345
          %v1358 = vpack.c.bf16 %v1350, %v1348
          %v1359 = vpack.c.bf16 %v1351, %v1349
          %v1368 = vunpack.c.l.b16 %v1352
          %v1369 = vunpack.c.l.b16 %v1353
          %v1370 = vunpack.c.h.b16 %v1352
          %v1371 = vunpack.c.h.b16 %v1353
          %v1372 = vunpack.c.l.b16 %v1354
          %v1373 = vunpack.c.l.b16 %v1355
          %v1374 = vunpack.c.h.b16 %v1354
          %v1375 = vunpack.c.h.b16 %v1355
          %v1376 = vunpack.c.l.b16 %v1356
          %v1377 = vunpack.c.l.b16 %v1357
          %v1378 = vunpack.c.h.b16 %v1356
          %v1379 = vunpack.c.h.b16 %v1357
          %v1380 = vunpack.c.l.b16 %v1358
          %v1381 = vunpack.c.l.b16 %v1359
          %v1382 = vunpack.c.h.b16 %v1358
          %v1383 = vunpack.c.h.b16 %v1359
          %v1384 = vpack.c.b16 %v1369, %v1368
          %v1385 = vpack.c.b16 %v1371, %v1370
          %v1386 = vpack.c.b16 %v1373, %v1372
          %v1387 = vpack.c.b16 %v1375, %v1374
          %v1388 = vpack.c.b16 %v1377, %v1376
          %v1389 = vpack.c.b16 %v1379, %v1378
          %v1390 = vpack.c.b16 %v1381, %v1380
          %v1391 = vpack.c.b16 %v1383, %v1382
          %1400 = vst [vmem:[%s279] sm:$0xff] %v1384
          %1401 = vst [vmem:[%s279 + $0x8] sm:$0xff] %v1385
          %1402 = vst [vmem:[%s279 + $0x10] sm:$0xff] %v1386
          %1403 = vst [vmem:[%s279 + $0x18] sm:$0xff] %v1387
          %1404 = vst [vmem:[%s279 + $0x20] sm:$0xff] %v1388
          %1405 = vst [vmem:[%s279 + $0x28] sm:$0xff] %v1389
          %1406 = vst [vmem:[%s279 + $0x30] sm:$0xff] %v1390
          %1407 = vst [vmem:[%s279 + $0x38] sm:$0xff] %v1391
        $region52: #{_mlp_pallas.1} parent=31 // pred_fallthru
          _
        %s1408 = sand.u32 %s121, 1
        %s1409 = scalar_lea.sflag [#allocation5], %s1408
        %s1410 = sand.u32 %s121, 1
        %s1411 = smul.addr %s1410, 64
        %s1412 = scalar_lea.vmem [#allocation9], %s1411
        // Predicated region
        $region53: #{_mlp_pallas.1} parent=31 // pred_check
          %p1413 = pneg %p131
        $region54: #{_mlp_pallas.1} parent=31 // pred_check_branch
          %1415 = sbr.rel (%p1413) target = $region56
        $region55: #{_mlp_pallas.1} parent=31 // pred_region
          %s1416 = smul.u32 8, %s27
          %s1418 = ssub.s32 1024, 1024
          %1419 = vsyncadd %s1409, %s1418
          %s1420 = smul.addr %s1416, 2
          %s1421 = smul.addr %s1420, 64
          %s1422 = scalar_lea.hbm %s3, %s1421
          %s1423 = sshll.u32 %s1412, 4
          %s1424 = int_to_ptr.vmem [resolvable:$true] %s1423
          %1429 = dma.vmem_to_hbm [thread:$0]  %s1424, 1024, %s1422, %s1409, 128, 128, 8
        $region56: #{_mlp_pallas.1} parent=31 // pred_fallthru
          _
      $region32: #{_mlp_pallas.1} parent=5 // pred_fallthru
        _
      %p1430 = scmp.le.s32.totalorder 2, %s18
      // Predicated region
      $region57: #{_mlp_pallas.1} parent=5 // pred_check
        %p1431 = pneg %p1430
      $region58: #{_mlp_pallas.1} parent=5 // pred_check_branch
        %1433 = sbr.rel (%p1431) target = $region60
      $region59: #{_mlp_pallas.1} parent=5 // pred_region
        %s1434 = ssub.s32 %s18, 2
        // Predicated region
        $region61: #{_mlp_pallas.1} parent=59 // pred_check
          %p1435 = pneg %p137
        $region62: #{_mlp_pallas.1} parent=59 // pred_check_branch
          %1437 = sbr.rel (%p1435) target = $region64
        $region63: #{_mlp_pallas.1} parent=59 // pred_region
          %s1438 = sand.u32 %s122, 1
          %s1439 = scalar_lea.sflag [#allocation5], %s1438
          %s1440 = sand.u32 %s122, 1
          %s1441 = smul.addr %s1440, 64
          %s1442 = scalar_lea.vmem [#allocation9], %s1441
          %1443 = dma.done %s1439, 1024
        $region64: #{_mlp_pallas.1} parent=59 // pred_fallthru
          _
      $region60: #{_mlp_pallas.1} parent=5 // pred_fallthru
        _
    $region6: #{_mlp_pallas.1} parent=1 // loop_footer
      %s22 = sadd.s32 1, %s18
    $region7: #{_mlp_pallas.1} parent=1 // loop_footer_branch
      %17 = sbr.rel target = $region3
    $region8: #{_mlp_pallas.1} parent=1 // loop_exit
      _
    %1444 = vsyncpa [#allocation4], 1
    %s1445 = scalar_lea.sflag [#allocation4], 1
    %1446 = vsyncpa %s1445, 1
    %1447 = vsyncpa [#allocation7], 1
    %s1448 = scalar_lea.sflag [#allocation7], 1
    %1449 = vsyncpa %s1448, 1
    %1450 = vsyncpa [#allocation5], 1
    %s1451 = scalar_lea.sflag [#allocation5], 1
    %1452 = vsyncpa %s1451, 1

</llo_original>
